<compile_context>
chip_gen: v5e
topology: v5e:2x2
jax: 0.10.0
libtpu: 0.0.40
codegen_flags: <defaults>
</compile_context>

<pallas_src>
import functools

import jax
import jax.numpy as jnp
from jax.experimental import pallas as pl
from jax.experimental.pallas import tpu as pltpu


# Flat 32 MiB scoped-VMEM request: > v5e's 16 MiB default, well above the
# <=10 MiB per-step working set, and leaves headroom on v7x's 64 MiB VMEM.
_VMEM_LIMIT = 32 * 1024 * 1024


def _round_up(x, m):
    return (x + m - 1) // m * m


@functools.lru_cache(maxsize=1)
def _max_tile_rows():
    """Generation-aware M-tile ceiling: 1024 rows on 128-MiB-VMEM parts
    (v5e/v6e), 512 rows on 64-MiB parts (v7x) or when the query fails."""
    try:
        cap = int(getattr(pltpu.get_tpu_info(), "vmem_capacity_bytes", 0))
    except Exception:  # no TPU info available -> conservative default
        cap = 0
    return 1024 if cap >= 100 * 1024 * 1024 else 512


# ----------------------------------------------------------------------------
# Pallas kernel: fused (multi-slab MXU matmul + BN bias + optional ReLU +
# optional residual add).  bf16 operands, f32 accumulation, K split across
# input slabs so channel concats never have to be materialized.
# ----------------------------------------------------------------------------
def _fused_conv_kernel(*refs, n_pairs, relu, has_residual):
    """refs layout: x_0, w_0, ..., x_{n-1}, w_{n-1}, bias, [residual], out."""
    xs = [refs[2 * i] for i in range(n_pairs)]
    ws = [refs[2 * i + 1] for i in range(n_pairs)]
    b_ref = refs[2 * n_pairs]
    r_ref = refs[2 * n_pairs + 1] if has_residual else None
    o_ref = refs[-1]

    acc = jnp.dot(xs[0][...], ws[0][...], preferred_element_type=jnp.float32)
    for x_ref, w_ref in zip(xs[1:], ws[1:]):
        acc += jnp.dot(x_ref[...], w_ref[...], preferred_element_type=jnp.float32)

    acc = acc + b_ref[...]                       # folded BatchNorm bias (f32)
    if relu:
        acc = jnp.maximum(acc, 0.0)
    if has_residual:
        acc = acc + r_ref[...].astype(jnp.float32)   # BasicBlock skip (f32 add)
    o_ref[...] = acc.astype(o_ref.dtype)


def fused_conv_matmul(patch_list, w_list, bias, residual=None, relu=False,
                      out_dtype=jnp.bfloat16):
    """patch_list[i]: (M, K_i) bf16, w_list[i]: (K_i, Cout) bf16 (BN scale
    folded), bias: (1, Cout) f32, residual: (M, Cout) bf16 or None.
    Returns (M, Cout) in `out_dtype`."""
    M = patch_list[0].shape[0]
    Cout = w_list[0].shape[1]
    has_res = residual is not None

    # --- M tile: at least 2 grid steps when possible (v7x megacore), tiles
    # are multiples of 16 for bf16 sublane packing.  Ragged last blocks are
    # handled by Pallas (partial loads / masked stores) -> no jnp.pad copies.
    tm_max = _max_tile_rows()
    tm = max(16, min(tm_max, _round_up(-(-M // 2), 16)))
    grid_m = pl.cdiv(M, tm)

    n_pairs = len(patch_list)
    kernel = functools.partial(
        _fused_conv_kernel, n_pairs=n_pairs, relu=relu, has_residual=has_res)

    in_arrays, in_specs = [], []
    k_total = 0
    for p, w in zip(patch_list, w_list):
        K = p.shape[1]
        k_total += K
        in_arrays += [p, w]
        in_specs += [
            pl.BlockSpec((tm, K), lambda i: (i, 0)),    # streamed per M tile
            pl.BlockSpec((K, Cout), lambda i: (0, 0)),  # weights VMEM-resident
        ]
        # TODO(synk): pipeline_mode=pl.Buffered(1) on the resident weight/bias
        # specs would save ~1 MiB VMEM in the 6-slab calls; omitted to keep
        # lowering risk at zero.
    in_arrays.append(bias)
    in_specs.append(pl.BlockSpec((1, Cout), lambda i: (0, 0)))
    if has_res:
        in_arrays.append(residual)
        in_specs.append(pl.BlockSpec((tm, Cout), lambda i: (i, 0)))

    bytes_accessed = (
        sum(int(p.size) * p.dtype.itemsize for p in patch_list)
        + sum(int(w.size) * w.dtype.itemsize for w in w_list)
        + int(bias.size) * bias.dtype.itemsize
        + (int(residual.size) * residual.dtype.itemsize if has_res else 0)
        + M * Cout * jnp.dtype(out_dtype).itemsize)
    cost = pl.CostEstimate(flops=2 * M * k_total * Cout,
                           transcendentals=0,
                           bytes_accessed=bytes_accessed)

    return pl.pallas_call(
        kernel,
        grid=(grid_m,),
        in_specs=in_specs,
        out_specs=pl.BlockSpec((tm, Cout), lambda i: (i, 0)),
        out_shape=jax.ShapeDtypeStruct((M, Cout), out_dtype),
        compiler_params=pltpu.CompilerParams(
            dimension_semantics=("parallel",),
            vmem_limit_bytes=_VMEM_LIMIT,
        ),
        cost_estimate=cost,
    )(*in_arrays)


# ----------------------------------------------------------------------------
# conv + BN (+ ReLU) (+ residual) wrapper; im2col is JAX glue (bf16), matmul
# is Pallas.  `xs` is a list of NHWC tensors that are the channel-concat
# components of the conv input (concats are never materialized: each
# component becomes its own K slab).
# ----------------------------------------------------------------------------
def conv_bn(xs, p, ksize, stride, pad, dilation, relu=False, residual=None,
            out_dtype=jnp.bfloat16):
    """Reproduces convbn(): padding = dilation if dilation > 1 else pad."""
    assert not (relu and residual is not None), (
        "ReLU-before-residual is not used by this network (the PyTorch "
        "BasicBlock has no ReLU between conv2 and the skip add).")

    N, H, W, _ = xs[0].shape
    padding = dilation if dilation > 1 else pad
    eff = (ksize - 1) * dilation + 1
    Ho = (H + 2 * padding - eff) // stride + 1
    Wo = (W + 2 * padding - eff) // stride + 1
    M = N * Ho * Wo

    Cout = p["w"].shape[-1]
    scale = p["scale"].astype(jnp.float32)

    patch_list, w_list = [], []
    c_off = 0
    for x in xs:
        C = x.shape[-1]
        xp = x.astype(jnp.bfloat16)              # bf16 im2col: half HBM traffic
        if padding:
            xp = jnp.pad(xp, ((0, 0), (padding, padding),
                              (padding, padding), (0, 0)))
        cols = []
        for kh in range(ksize):
            for kw in range(ksize):
                hs, ws = kh * dilation, kw * dilation
                cols.append(
                    xp[:, hs:hs + (Ho - 1) * stride + 1:stride,
                          ws:ws + (Wo - 1) * stride + 1:stride, :])
        if len(cols) == 1:
            patches = cols[0].reshape(M, C)           # 1x1 conv: free reshape
        else:
            patches = jnp.concatenate(cols, axis=-1).reshape(M, ksize * ksize * C)
        patch_list.append(patches)
        # Weight slab for this input component, BN scale folded into columns.
        w_c = p["w"][:, :, c_off:c_off + C, :] * scale[None, None, None, :]
        w_list.append(w_c.reshape(ksize * ksize * C, Cout).astype(jnp.bfloat16))
        c_off += C
    # TODO(synk): stream the 3x3 taps straight from the padded NHWC input
    # (element-offset index maps / manual-DMA halo strips) so the 9x im2col
    # patch matrix is never written to HBM; needs robust in-kernel
    # (th, Wo, C)->(th*Wo, C) relayout across all stride/dilation variants.

    bias = p["bias"].astype(jnp.float32).reshape(1, Cout)
    res = None
    if residual is not None:
        res = residual.reshape(M, Cout).astype(jnp.bfloat16)
    out = fused_conv_matmul(patch_list, w_list, bias, residual=res, relu=relu,
                            out_dtype=out_dtype)
    return out.reshape(N, Ho, Wo, Cout)


# ----------------------------------------------------------------------------
# Deterministic parameter construction (mirrors the PyTorch module structure)
# ----------------------------------------------------------------------------
class _KeyGen:
    def __init__(self, key):
        self._key = key
        self._i = 0

    def __call__(self):
        self._i += 1
        return jax.random.fold_in(self._key, self._i)


def _convbn_params(key, cin, cout, ksize, with_bn=True):
    kw, ks, kb = jax.random.split(key, 3)
    fan_in = cin * ksize * ksize
    w = jax.random.normal(kw, (ksize, ksize, cin, cout), jnp.float32) / jnp.sqrt(
        jnp.float32(fan_in))
    if with_bn:
        # eval-mode BN folded into an affine: scale = gamma/sqrt(var+eps),
        # bias = beta - mean*scale
        scale = 1.0 + 0.1 * jax.random.normal(ks, (cout,), jnp.float32)
        bias = 0.1 * jax.random.normal(kb, (cout,), jnp.float32)
    else:
        scale = jnp.ones((cout,), jnp.float32)
        bias = jnp.zeros((cout,), jnp.float32)
    return {"w": w, "scale": scale, "bias": bias}


def _make_layer(kg, inplanes, planes, blocks, stride, pad, dilation):
    layer = []
    down = None
    if stride != 1 or inplanes != planes:
        down = _convbn_params(kg(), inplanes, planes, 1)
    layer.append({
        "conv1": _convbn_params(kg(), inplanes, planes, 3),
        "conv2": _convbn_params(kg(), planes, planes, 3),
        "down": down, "stride": stride, "pad": pad, "dilation": dilation,
    })
    for _ in range(1, blocks):
        layer.append({
            "conv1": _convbn_params(kg(), planes, planes, 3),
            "conv2": _convbn_params(kg(), planes, planes, 3),
            "down": None, "stride": 1, "pad": pad, "dilation": dilation,
        })
    return layer, planes


def build_params(key):
    kg = _KeyGen(key)
    params = {}
    params["firstconv"] = [
        _convbn_params(kg(), 3, 32, 3),
        _convbn_params(kg(), 32, 32, 3),
        _convbn_params(kg(), 32, 32, 3),
    ]
    inplanes = 32
    params["layer1"], inplanes = _make_layer(kg, inplanes, 32, 3, 1, 1, 1)
    params["layer2"], inplanes = _make_layer(kg, inplanes, 64, 16, 2, 1, 1)
    params["layer3"], inplanes = _make_layer(kg, inplanes, 128, 3, 1, 1, 1)
    params["layer4"], inplanes = _make_layer(kg, inplanes, 128, 3, 1, 1, 2)
    params["aspp1"] = _convbn_params(kg(), 160, 32, 1)
    params["aspp2"] = _convbn_params(kg(), 160, 32, 3)
    params["aspp3"] = _convbn_params(kg(), 160, 32, 3)
    params["aspp4"] = _convbn_params(kg(), 160, 32, 3)
    params["aspp5"] = _convbn_params(kg(), 160, 32, 3)
    params["newlastconv"] = [
        _convbn_params(kg(), 224, 128, 3),
        _convbn_params(kg(), 128, 32, 1, with_bn=False),  # plain 1x1, no BN/ReLU
    ]
    params["firstcoord"] = [
        _convbn_params(kg(), 1, 32, 3),
        _convbn_params(kg(), 32, 32, 3),
        _convbn_params(kg(), 32, 32, 3),
    ]
    return params


# ----------------------------------------------------------------------------
# Forward pass (mirrors feature_extraction.forward)
# ----------------------------------------------------------------------------
def _run_basic_block(x, bp):
    out = conv_bn([x], bp["conv1"], 3, bp["stride"], bp["pad"], bp["dilation"],
                  relu=True)
    if bp["down"] is not None:
        # TODO(synk): fuse this 1x1 downsample into conv1's matmul (center-tap
        # weight rows, extra Cout columns) for the two layer-entry blocks.
        res = conv_bn([x], bp["down"], 1, bp["stride"], 0, 1, relu=False)
    else:
        res = x
    # conv2 (no ReLU after the add, matching the PyTorch BasicBlock) with the
    # residual add fused into the Pallas kernel.
    return conv_bn([out], bp["conv2"], 3, 1, bp["pad"], bp["dilation"],
                   relu=False, residual=res)


def _run_layer(x, layer):
    for bp in layer:
        x = _run_basic_block(x, bp)
    return x


def feature_extraction_forward(x_nchw, params):
    x = jnp.transpose(x_nchw, (0, 2, 3, 1))        # NHWC
    rgb, coord = x[..., :3], x[..., 3:]

    out = conv_bn([rgb], params["firstconv"][0], 3, 2, 1, 1, relu=True)
    out = conv_bn([out], params["firstconv"][1], 3, 1, 1, 1, relu=True)
    out = conv_bn([out], params["firstconv"][2], 3, 1, 1, 1, relu=True)

    out = _run_layer(out, params["layer1"])
    output_raw = _run_layer(out, params["layer2"])
    out = _run_layer(output_raw, params["layer3"])
    output_skip = _run_layer(out, params["layer4"])

    oc = conv_bn([coord], params["firstcoord"][0], 3, 2, 1, 1, relu=True)
    oc = conv_bn([oc], params["firstcoord"][1], 3, 2, 1, 1, relu=True)
    oc = conv_bn([oc], params["firstcoord"][2], 3, 1, 1, 1, relu=True)

    # (output_skip, out_coord) concat (128 + 32 = 160 ch) is never
    # materialized: the two components are separate K slabs in every ASPP call.
    skip_parts = [output_skip, oc]
    a1 = conv_bn(skip_parts, params["aspp1"], 1, 1, 0, 1, relu=True)
    a2 = conv_bn(skip_parts, params["aspp2"], 3, 1, 1, 6, relu=True)
    a3 = conv_bn(skip_parts, params["aspp3"], 3, 1, 1, 12, relu=True)
    a4 = conv_bn(skip_parts, params["aspp4"], 3, 1, 1, 18, relu=True)
    a5 = conv_bn(skip_parts, params["aspp5"], 3, 1, 1, 24, relu=True)

    # 224-ch feature concat is likewise split across six K slabs in-kernel.
    feat_parts = [output_raw, a1, a2, a3, a4, a5]
    feat = conv_bn(feat_parts, params["newlastconv"][0], 3, 1, 1, 1, relu=True)
    feat = conv_bn([feat], params["newlastconv"][1], 1, 1, 0, 1, relu=False,
                   out_dtype=jnp.float32)          # final output in f32

    return jnp.transpose(feat, (0, 3, 1, 2))       # NCHW: (N, 32, H/4, W/4)


# ----------------------------------------------------------------------------
if __name__ == "__main__":
    root = jax.random.PRNGKey(0)
    params = build_params(jax.random.fold_in(root, 1))
    x = jax.random.normal(jax.random.fold_in(root, 2), (2, 4, 16, 16), jnp.float32)

    out = feature_extraction_forward(x, params)
    out = jax.block_until_ready(out)

    assert out.shape == (2, 32, 4, 4), out.shape
    assert bool(jnp.all(jnp.isfinite(out)))
    print("KERNEL_OK")
</pallas_src>

<mosaic_0001>
module attributes {stable_mosaic.version = 11 : i64} {
  func.func @_fused_conv_kernel(%arg0: i32, %arg1: memref<64x27xbf16, #tpu.memory_space<vmem>>, %arg2: memref<27x32xbf16, #tpu.memory_space<vmem>>, %arg3: memref<1x32xf32, #tpu.memory_space<vmem>>, %arg4: memref<64x32xbf16, #tpu.memory_space<vmem>>) attributes {dimension_semantics = [#tpu.dimension_semantics<parallel>], iteration_bounds = array<i64: 2>, scalar_prefetch = 0 : i64, scratch_operands = 0 : i64, tpu.core_type = #tpu.core_type<tc>, window_params = [{transform_indices = @transform_0, window_bounds = array<i64: 64, 27>}, {pipeline_mode = #tpu.pipeline_mode<synchronous>, transform_indices = @transform_1, window_bounds = array<i64: 27, 32>}, {pipeline_mode = #tpu.pipeline_mode<synchronous>, transform_indices = @transform_2, window_bounds = array<i64: 1, 32>}, {transform_indices = @transform_3, window_bounds = array<i64: 64, 32>}]} {
    %c0 = arith.constant 0 : index
    %c0_0 = arith.constant 0 : index
    %0 = vector.load %arg1[%c0, %c0_0] : memref<64x27xbf16, #tpu.memory_space<vmem>>, vector<64x27xbf16>
    %c0_1 = arith.constant 0 : index
    %c0_2 = arith.constant 0 : index
    %1 = vector.load %arg2[%c0_1, %c0_2] : memref<27x32xbf16, #tpu.memory_space<vmem>>, vector<27x32xbf16>
    %cst = arith.constant dense<0.000000e+00> : vector<64x32xf32>
    %2 = tpu.matmul %0, %1, %cst {dimension_numbers = #tpu.dot_dimension_numbers<[1], [0], [0], [1], [0, 0, 1, 1], [], []>} : vector<64x27xbf16>, vector<27x32xbf16>, vector<64x32xf32> -> vector<64x32xf32>
    %c0_3 = arith.constant 0 : index
    %c0_4 = arith.constant 0 : index
    %3 = vector.load %arg3[%c0_3, %c0_4] : memref<1x32xf32, #tpu.memory_space<vmem>>, vector<1x32xf32>
    %4 = vector.broadcast %3 : vector<1x32xf32> to vector<64x32xf32>
    %5 = arith.addf %2, %4 : vector<64x32xf32>
    %cst_5 = arith.constant 0.000000e+00 : f32
    %6 = vector.broadcast %cst_5 : f32 to vector<64x32xf32>
    %7 = arith.maximumf %5, %6 : vector<64x32xf32>
    %8 = arith.truncf %7 : vector<64x32xf32> to vector<64x32xbf16>
    %c0_6 = arith.constant 0 : index
    %c0_7 = arith.constant 0 : index
    %9 = vector.load %arg4[%c0_6, %c0_7] : memref<64x32xbf16, #tpu.memory_space<vmem>>, vector<64x32xbf16>
    tpu.vector_store %arg4[%c0_6, %c0_7], %8 {strides = array<i32>} : memref<64x32xbf16, #tpu.memory_space<vmem>>, vector<64x32xbf16>,
    return
  }
  func.func @transform_0(%arg0: i32) -> (i32, i32) {
    %c0_i32 = arith.constant 0 : i32
    %c0_i32_0 = arith.constant 0 : i32
    return %arg0, %c0_i32 : i32, i32
  }
  func.func @transform_1(%arg0: i32) -> (i32, i32) {
    %c0_i32 = arith.constant 0 : i32
    %c0_i32_0 = arith.constant 0 : i32
    %c0_i32_1 = arith.constant 0 : i32
    return %c0_i32, %c0_i32_0 : i32, i32
  }
  func.func @transform_2(%arg0: i32) -> (i32, i32) {
    %c0_i32 = arith.constant 0 : i32
    %c0_i32_0 = arith.constant 0 : i32
    %c0_i32_1 = arith.constant 0 : i32
    return %c0_i32, %c0_i32_0 : i32, i32
  }
  func.func @transform_3(%arg0: i32) -> (i32, i32) {
    %c0_i32 = arith.constant 0 : i32
    %c0_i32_0 = arith.constant 0 : i32
    return %arg0, %c0_i32 : i32, i32
  }
}

</mosaic_0001>

<llo_original>
// kernel: tpu_custom_call.1
$region0: #{tpu_custom_call.1}
  #allocation0 [shape = 'u32[]', space=smem, size = 0x4, offset = 0x4, fixed_abs, tag = 'smem constant byte address 0x4 - core index']
  #allocation1 [shape = 'u32[72,128]{1,0:T(1,128)}', space=vmem, size = 0x9000, scoped, tag = 'internal scratch']
  %s0 = inlined_call_operand.vmem [shape: bf16[128,27], index: 0, kind: input, shape index: {}]
  %s1 = inlined_call_operand.vmem [shape: bf16[27,32], index: 1, kind: input, shape index: {}]
  %s2 = inlined_call_operand.vmem [shape: f32[1,32], index: 2, kind: input, shape index: {}]
  %s3 = inlined_call_operand.vmem [shape: bf16[128,32], index: 3, kind: output, shape index: {}]
  %s4 = sld [smem:[#allocation0]]
  $region45: #{tpu_custom_call.1} parent=0
    _
  %s6 = ssub.s32 1, %s4
  %s7 = scalar_select 0, %s6, %s4
  loop: start=0, step=1, limit=4
  $region2: #{tpu_custom_call.1} parent=0 // loop_pre_header
    _
  $region3: #{tpu_custom_call.1} parent=0 // loop_header
    %s9 = sphi 0, %s13
    %p10 = scmp.ge.s32.totalorder %s9, 4
    %s19 = sphi 0, %s21
    %s22 = sphi 0, %s19
    %s23 = sphi 0, %s22
    %s39 = sphi 0, %s23
    %s43 = sphi 0, %s43
    %s45 = sphi 0, %s43
    %s46 = sphi 0, %s45
    %s60 = sphi 0, %s46
    %s64 = sphi 0, %s64
    %s66 = sphi 0, %s64
    %s67 = sphi 0, %s66
    %s81 = sphi 0, %s67
    %s87 = sphi 0, %s89
    %s90 = sphi 0, %s87
    %s91 = sphi 0, %s90
    %s107 = sphi 0, %s91
  $region4: #{tpu_custom_call.1} parent=0 // loop_header_branch
    %12 = sbr.rel (%p10) target = $region8
  $region5: #{tpu_custom_call.1} parent=0 // loop_body
    %s14 = ssub.s32 %s9, 1
    %s15 = ssub.s32 %s9, 2
    %s16 = sadd.s32 %s9, 1
    %s17 = ssub.s32 %s9, %s16
    %p18 = scmp.eq.s32.totalorder %s17, 0
    %s20 = sadd.s32 %s19, 1
    %s21 = scalar_select %p18, %s19, %s20
    %p24 = pneg %p18
    %p25 = scmp.eq.s32.totalorder %s9, 1
    %p26 = por %p24, %p25
    %p27 = scmp.ne.s32.totalorder %s19, %s22
    %p28 = scmp.eq.s32.totalorder %s9, 0
    %p29 = por %p27, %p28
    %p30 = scmp.ne.s32.totalorder %s19, %s22
    %p31 = scmp.eq.s32.totalorder %s14, 1
    %p32 = por %p30, %p31
    %p33 = scmp.ne.s32.totalorder %s22, %s23
    %p34 = scmp.eq.s32.totalorder %s14, 0
    %p35 = por %p33, %p34
    %p36 = scmp.ne.s32.totalorder %s22, %s23
    %p37 = scmp.eq.s32.totalorder %s15, 1
    %p38 = por %p36, %p37
    %p40 = scmp.ne.s32.totalorder %s23, %s39
    %p41 = scmp.eq.s32.totalorder %s15, 0
    %p42 = por %p40, %p41
    %s44 = sadd.s32 %s43, 1
    %p47 = scmp.eq.s32.totalorder %s9, 1
    %p48 = scmp.ne.s32.totalorder %s43, %s45
    %p49 = scmp.eq.s32.totalorder %s9, 0
    %p50 = por %p48, %p49
    %p51 = scmp.ne.s32.totalorder %s43, %s45
    %p52 = scmp.eq.s32.totalorder %s14, 1
    %p53 = por %p51, %p52
    %p54 = scmp.ne.s32.totalorder %s45, %s46
    %p55 = scmp.eq.s32.totalorder %s14, 0
    %p56 = por %p54, %p55
    %p57 = scmp.ne.s32.totalorder %s45, %s46
    %p58 = scmp.eq.s32.totalorder %s15, 1
    %p59 = por %p57, %p58
    %p61 = scmp.ne.s32.totalorder %s46, %s60
    %p62 = scmp.eq.s32.totalorder %s15, 0
    %p63 = por %p61, %p62
    %s65 = sadd.s32 %s64, 1
    %p68 = scmp.eq.s32.totalorder %s9, 1
    %p69 = scmp.ne.s32.totalorder %s64, %s66
    %p70 = scmp.eq.s32.totalorder %s9, 0
    %p71 = por %p69, %p70
    %p72 = scmp.ne.s32.totalorder %s64, %s66
    %p73 = scmp.eq.s32.totalorder %s14, 1
    %p74 = por %p72, %p73
    %p75 = scmp.ne.s32.totalorder %s66, %s67
    %p76 = scmp.eq.s32.totalorder %s14, 0
    %p77 = por %p75, %p76
    %p78 = scmp.ne.s32.totalorder %s66, %s67
    %p79 = scmp.eq.s32.totalorder %s15, 1
    %p80 = por %p78, %p79
    %p82 = scmp.ne.s32.totalorder %s67, %s81
    %p83 = scmp.eq.s32.totalorder %s15, 0
    %p84 = por %p82, %p83
    %s85 = ssub.s32 %s9, %s16
    %p86 = scmp.eq.s32.totalorder %s85, 0
    %s88 = sadd.s32 %s87, 1
    %s89 = scalar_select %p86, %s87, %s88
    %p92 = pneg %p86
    %p93 = scmp.eq.s32.totalorder %s9, 1
    %p94 = por %p92, %p93
    %p95 = scmp.ne.s32.totalorder %s87, %s90
    %p96 = scmp.eq.s32.totalorder %s9, 0
    %p97 = por %p95, %p96
    %p98 = scmp.ne.s32.totalorder %s87, %s90
    %p99 = scmp.eq.s32.totalorder %s14, 1
    %p100 = por %p98, %p99
    %p101 = scmp.ne.s32.totalorder %s90, %s91
    %p102 = scmp.eq.s32.totalorder %s14, 0
    %p103 = por %p101, %p102
    %p104 = scmp.ne.s32.totalorder %s90, %s91
    %p105 = scmp.eq.s32.totalorder %s15, 1
    %p106 = por %p104, %p105
    %p108 = scmp.ne.s32.totalorder %s91, %s107
    %p109 = scmp.eq.s32.totalorder %s15, 0
    %p110 = por %p108, %p109
    %p111 = scmp.le.s32.totalorder 1, %s9
    %p112 = scmp.lt.s32.totalorder %s9, 3
    %p113 = pnand %p111, %p112
    %p114 = pneg %p113
    // Predicated region
    $region9: #{tpu_custom_call.1} parent=5 // pred_check
      _
    $region10: #{tpu_custom_call.1} parent=5 // pred_check_branch
      %116 = sbr.rel (%p113) target = $region12
    $region11: #{tpu_custom_call.1} parent=5 // pred_region
      %s117 = ssub.s32 %s9, 1
      // Predicated region
      $region13: #{tpu_custom_call.1} parent=11 // pred_check
        %p118 = pneg %p56
      $region14: #{tpu_custom_call.1} parent=11 // pred_check_branch
        %120 = sbr.rel (%p118) target = $region16
      $region15: #{tpu_custom_call.1} parent=11 // pred_region
        _
      $region16: #{tpu_custom_call.1} parent=11 // pred_fallthru
        _
      // Predicated region
      $region17: #{tpu_custom_call.1} parent=11 // pred_check
        %p121 = pneg %p77
      $region18: #{tpu_custom_call.1} parent=11 // pred_check_branch
        %123 = sbr.rel (%p121) target = $region20
      $region19: #{tpu_custom_call.1} parent=11 // pred_region
        _
      $region20: #{tpu_custom_call.1} parent=11 // pred_fallthru
        _
    $region12: #{tpu_custom_call.1} parent=5 // pred_fallthru
      _
    %p124 = scmp.lt.s32.totalorder %s9, 2
    // Predicated region
    $region21: #{tpu_custom_call.1} parent=5 // pred_check
      %p125 = pneg %p124
    $region22: #{tpu_custom_call.1} parent=5 // pred_check_branch
      %127 = sbr.rel (%p125) target = $region24
    $region23: #{tpu_custom_call.1} parent=5 // pred_region
      // Predicated region
      $region25: #{tpu_custom_call.1} parent=23 // pred_check
        %p128 = pneg %p29
      $region26: #{tpu_custom_call.1} parent=23 // pred_check_branch
        %130 = sbr.rel (%p128) target = $region28
      $region27: #{tpu_custom_call.1} parent=23 // pred_region
        %s131 = smul.u32 8, %s9
        %p132 = scmp.lt.s32.totalorder %s131, 15
        %s133 = scalar_select %p132, %s131, 15
        %s134 = smul.addr %s133, 4
        %s135 = scalar_lea.vmem %s0, %s134
        %s136 = smul.u32 8, %s9
      $region28: #{tpu_custom_call.1} parent=23 // pred_fallthru
        _
    $region24: #{tpu_custom_call.1} parent=5 // pred_fallthru
      _
    %p137 = scmp.le.s32.totalorder 1, %s9
    %p138 = scmp.lt.s32.totalorder %s9, 3
    %p139 = pnand %p137, %p138
    %p140 = pneg %p139
    // Predicated region
    $region29: #{tpu_custom_call.1} parent=5 // pred_check
      _
    $region30: #{tpu_custom_call.1} parent=5 // pred_check_branch
      %142 = sbr.rel (%p139) target = $region32
    $region31: #{tpu_custom_call.1} parent=5 // pred_region
      %s143 = ssub.s32 %s9, 1
      %s144 = smul.u32 8, %s14
      %p145 = scmp.lt.s32.totalorder %s144, 15
      %s146 = scalar_select %p145, %s144, 15
      %s147 = smul.addr %s146, 4
      %s148 = scalar_lea.vmem %s0, %s147
      %p149 = pneg %p35
      %p150 = pneg %p32
      %p151 = pneg %p56
      %p152 = pneg %p53
      %p153 = pneg %p77
      %p154 = pneg %p74
      %p155 = pneg %p103
      %p156 = pneg %p100
      %s157 = smul.u32 8, %s14
      %p158 = scmp.lt.s32.totalorder %s157, 15
      %s159 = scalar_select %p158, %s157, 15
      %s160 = smul.addr %s159, 4
      %s161 = scalar_lea.vmem %s3, %s160
      %s162 = smul.u32 8, %s14
      %p163 = scmp.lt.s32.totalorder %s162, 15
      %s164 = scalar_select %p163, %s162, 15
      %s165 = smul.addr %s164, 4
      %s166 = scalar_lea.vmem %s0, %s165
      %s167 = smul.u32 8, %s14
      %s168 = smul.u32 8, %s14
      %p169 = scmp.lt.s32.totalorder %s168, 15
      %s170 = scalar_select %p169, %s168, 15
      %s171 = smul.addr %s170, 4
      %s172 = scalar_lea.vmem %s3, %s171
      %s173 = smul.u32 8, %s14
      %v175 = vld [vmem:[%s166] sm:$0xf]
      %v176 = vld [vmem:[%s166 + $0x4] sm:$0xf]
      %v177 = vld [vmem:[%s166 + $0x8] sm:$0xf]
      %v178 = vld [vmem:[%s166 + $0xc] sm:$0xf]
      %v179 = vld [vmem:[%s166 + $0x10] sm:$0xf]
      %v180 = vld [vmem:[%s166 + $0x14] sm:$0xf]
      %v181 = vld [vmem:[%s166 + $0x18] sm:$0xf]
      %v182 = vld [vmem:[%s166 + $0x1c] sm:$0xf]
      %v183 = vld [vmem:[%s1] sm:$0xf]
      %v184 = vld [vmem:[%s1 + $0x4] sm:$0xf]
      %v185 = vld [vmem:[%s1 + $0x8] sm:$0xf]
      %v186 = vld [vmem:[%s1 + $0xc] sm:$0x3]
      %v187 = vld [vmem:[%s2] sm:$0x1]
      %v189 = vperm.slane %v187, 0
      %v199 = vunpack.c.l.b16 %v175
      %v200 = vunpack.c.l.b16 %v176
      %v201 = vunpack.c.l.b16 %v177
      %v202 = vunpack.c.l.b16 %v178
      %v203 = vunpack.c.l.b16 %v179
      %v204 = vunpack.c.l.b16 %v180
      %v205 = vunpack.c.l.b16 %v181
      %v206 = vunpack.c.l.b16 %v182
      %v207 = vpack.c.b16 %v200, %v199
      %v208 = vpack.c.b16 %v202, %v201
      %v209 = vpack.c.b16 %v204, %v203
      %v210 = vpack.c.b16 %v206, %v205
      %v215 = vunpack.c.l.b16 %v183
      %v216 = vunpack.c.l.b16 %v184
      %v217 = vunpack.c.l.b16 %v185
      %v218 = vunpack.c.l.b16 %v186
      %v219 = vpack.c.b16 %v216, %v215
      %v220 = vpack.c.b16 %v218, %v217
      %vm222 = vcmask 220160
      %v224 = vsel %vm222, %v207, 0
      %v227 = vsel %vm222, %v208, 0
      %v230 = vsel %vm222, %v209, 0
      %v233 = vsel %vm222, %v210, 0
      %vm235 = vcmask 1044480
      %vm236 = vcmask 1045504
      %v237 = vsel %vm235, 4294967295, 65535
      %v238 = vsel %vm236, %v237, 0
      %v240 = vand.u32 %v220, %v238
      %242 = vmatpush.bf16.msra.mxu0 0
      %243 = vmatpush.bf16.msra.mxu0 0
      %244 = vmatpush.bf16.msra.mxu0 0
      %245 = vmatpush.bf16.msra.mxu0 0
      %246 = vmatpush.bf16.msra.mxu0 0
      %247 = vmatpush.bf16.msra.mxu0 0
      %248 = vmatpush.bf16.msra.mxu0 %v240
      %249 = vmatpush.bf16.msra.mxu0 %v219
      %250 = vmatmul.bf16.gmra.mxu0 %v224
      %v251 = vpop.f32.mrf.mxu0
      %v252 = vadd.f32 %v189, %v251
      %v253 = vpop.f32.mrf.mxu0
      %v254 = vadd.f32 %v189, %v253
      %255 = vmatmul.bf16.gmra.mxu0 %v227
      %v256 = vpop.f32.mrf.mxu0
      %v257 = vadd.f32 %v189, %v256
      %v258 = vpop.f32.mrf.mxu0
      %v259 = vadd.f32 %v189, %v258
      %260 = vmatmul.bf16.gmra.mxu0 %v230
      %v261 = vpop.f32.mrf.mxu0
      %v262 = vadd.f32 %v189, %v261
      %v263 = vpop.f32.mrf.mxu0
      %v264 = vadd.f32 %v189, %v263
      %265 = vmatmul.bf16.gmra.mxu0 %v233
      %v266 = vpop.f32.mrf.mxu0
      %v267 = vadd.f32 %v189, %v266
      %v268 = vpop.f32.mrf.mxu0
      %v269 = vadd.f32 %v189, %v268
      %270 = vdwg.mxu0
      %v271 = vmax.f32 %v252, 0.0
      %v272 = vmax.f32 %v254, 0.0
      %v273 = vmax.f32 %v257, 0.0
      %v274 = vmax.f32 %v259, 0.0
      %v275 = vmax.f32 %v262, 0.0
      %v276 = vmax.f32 %v264, 0.0
      %v277 = vmax.f32 %v267, 0.0
      %v278 = vmax.f32 %v269, 0.0
      %v279 = vpack.c.bf16 %v271, %v271
      %v280 = vpack.c.bf16 %v272, %v272
      %v281 = vpack.c.bf16 %v273, %v273
      %v282 = vpack.c.bf16 %v274, %v274
      %v283 = vpack.c.bf16 %v275, %v275
      %v284 = vpack.c.bf16 %v276, %v276
      %v285 = vpack.c.bf16 %v277, %v277
      %v286 = vpack.c.bf16 %v278, %v278
      %vm287 = vcmask 257024
      %288 = vst.msk [vmem:[%s172] sm:$0xf] %vm287, %v279
      %289 = vst.msk [vmem:[%s172 + $0x4] sm:$0xf] %vm287, %v280
      %290 = vst.msk [vmem:[%s172 + $0x8] sm:$0xf] %vm287, %v281
      %291 = vst.msk [vmem:[%s172 + $0xc] sm:$0xf] %vm287, %v282
      %292 = vst.msk [vmem:[%s172 + $0x10] sm:$0xf] %vm287, %v283
      %293 = vst.msk [vmem:[%s172 + $0x14] sm:$0xf] %vm287, %v284
      %294 = vst.msk [vmem:[%s172 + $0x18] sm:$0xf] %vm287, %v285
      %295 = vst.msk [vmem:[%s172 + $0x1c] sm:$0xf] %vm287, %v286
      %s296 = smul.u32 8, %s14
      %p297 = scmp.lt.s32.totalorder %s296, 15
      %s298 = scalar_select %p297, %s296, 15
      %s299 = smul.addr %s298, 4
      %s300 = scalar_lea.vmem %s3, %s299
      // Predicated region
      $region33: #{tpu_custom_call.1} parent=31 // pred_check
        %p301 = pneg %p100
      $region34: #{tpu_custom_call.1} parent=31 // pred_check_branch
        %303 = sbr.rel (%p301) target = $region36
      $region35: #{tpu_custom_call.1} parent=31 // pred_region
        %s304 = smul.u32 8, %s14
      $region36: #{tpu_custom_call.1} parent=31 // pred_fallthru
        _
    $region32: #{tpu_custom_call.1} parent=5 // pred_fallthru
      _
    %p305 = scmp.le.s32.totalorder 2, %s9
    // Predicated region
    $region37: #{tpu_custom_call.1} parent=5 // pred_check
      %p306 = pneg %p305
    $region38: #{tpu_custom_call.1} parent=5 // pred_check_branch
      %308 = sbr.rel (%p306) target = $region40
    $region39: #{tpu_custom_call.1} parent=5 // pred_region
      %s309 = ssub.s32 %s9, 2
      // Predicated region
      $region41: #{tpu_custom_call.1} parent=39 // pred_check
        %p310 = pneg %p106
      $region42: #{tpu_custom_call.1} parent=39 // pred_check_branch
        %312 = sbr.rel (%p310) target = $region44
      $region43: #{tpu_custom_call.1} parent=39 // pred_region
        %s313 = smul.u32 8, %s15
        %p314 = scmp.lt.s32.totalorder %s313, 15
        %s315 = scalar_select %p314, %s313, 15
        %s316 = smul.addr %s315, 4
        %s317 = scalar_lea.vmem %s3, %s316
      $region44: #{tpu_custom_call.1} parent=39 // pred_fallthru
        _
    $region40: #{tpu_custom_call.1} parent=5 // pred_fallthru
      _
  $region6: #{tpu_custom_call.1} parent=0 // loop_footer
    %s13 = sadd.s32 1, %s9
  $region7: #{tpu_custom_call.1} parent=0 // loop_footer_branch
    %8 = sbr.rel target = $region3
  $region8: #{tpu_custom_call.1} parent=0 // loop_exit
    _

</llo_original>
